<compile_context>
chip_gen: v5e
topology: v5e:2x2
jax: 0.10.0
libtpu: 0.0.40
codegen_flags: <defaults>
</compile_context>

<pallas_src>
import numpy as np
import jax
import jax.numpy as jnp
from jax.experimental import pallas as pl
from jax.experimental.pallas import tpu as pltpu

# Model dims implied by the PyTorch module.
B = 2          # batch
L = 4          # sequence length (fc_shared expects 16*4 = 64 inputs)
K = 3          # conv kernel size
C_OUT = 16     # conv out channels
HID = 32       # fc_shared hidden size
F = C_OUT * L  # 64 flattened conv features (channel-major, PyTorch .view order)

# TPU-friendly padded dims.
LANES = 128    # lane-dense width for every matmul output / the weight slab
B_PAD = 8      # sublane-dense batch

# Row layout of the single weight slab (each piece starts on an 8-row boundary).
R_W1 = 0                  # rows 0..3    : conv-as-matmul weight  (L, LANES)
R_B1 = 8                  # row  8       : conv bias row          (1, LANES)
R_W23 = 16                # rows 16..143 : fused fc_shared@heads  (LANES, LANES)
R_B23 = R_W23 + LANES     # row  144     : fused head bias row    (1, LANES)
SLAB_ROWS = 152           # padded to a multiple of 8


def multitask_kernel(x_ref, w_ref, out_ref):
    x = x_ref[...]                                    # (B_PAD, L)

    # Static, tile-aligned views into the single weight slab (no extra DMAs).
    w1 = w_ref[R_W1:R_W1 + L, :]                      # (L, LANES)
    b1 = w_ref[R_B1:R_B1 + 1, :]                      # (1, LANES)
    w23 = w_ref[R_W23:R_W23 + LANES, :]               # (LANES, LANES)
    b23 = w_ref[R_B23:R_B23 + 1, :]                   # (1, LANES)

    # Conv1d(pad=1) + bias + ReLU, expressed as one MXU dot + VPU row-add.
    feat = jnp.maximum(
        jnp.dot(x, w1, preferred_element_type=jnp.float32,
                precision=jax.lax.Precision.HIGHEST) + b1, 0.0)     # (B_PAD, LANES)

    # fc_shared and both heads fused into a single dot (W23 = W_shared^T @ W_heads).
    heads = jnp.dot(feat, w23, preferred_element_type=jnp.float32,
                    precision=jax.lax.Precision.HIGHEST) + b23      # (B_PAD, LANES)

    # Column 0 = sigmoid(binary logit), column 1 = regression; others are padding.
    sig = jax.nn.sigmoid(heads)
    col = jax.lax.broadcasted_iota(jnp.int32, heads.shape, 1)
    out_ref[...] = jnp.where(col == 0, sig, heads)


def pack_params(params):
    """One-time packing of PyTorch-layout params into a single (152,128) f32 slab."""
    wc = np.asarray(params["conv_w"], np.float64)[:, 0, :]     # (C_OUT, K)
    bc = np.asarray(params["conv_b"], np.float64)              # (C_OUT,)
    ws = np.asarray(params["fc_shared_w"], np.float64)         # (HID, F)
    bs = np.asarray(params["fc_shared_b"], np.float64)         # (HID,)
    wb = np.asarray(params["fc_binary_w"], np.float64)         # (1, HID)
    bb = np.asarray(params["fc_binary_b"], np.float64)         # (1,)
    wr = np.asarray(params["fc_regression_w"], np.float64)     # (1, HID)
    br = np.asarray(params["fc_regression_b"], np.float64)     # (1,)

    # Stage 1: x (L) -> conv feature at flat index c*L+l (channel-major .view order).
    # conv[b,c,l] = sum_k wc[c,k] * x[b, l+k-1]   (padding=1; out-of-range taps = 0)
    w1 = np.zeros((L, LANES), np.float64)
    for c in range(C_OUT):
        for l in range(L):
            for k in range(K):
                m = l + k - 1
                if 0 <= m < L:
                    w1[m, c * L + l] = wc[c, k]
    b1 = np.zeros(LANES, np.float64)
    b1[:F] = np.repeat(bc, L)                                  # column c*L+l gets bc[c]

    # Stage 2+3 fused (no nonlinearity between shared and heads):
    #   W23 = W_shared^T @ [w_binary | w_regression],  b23 = b_shared @ heads + head bias.
    w_heads = np.stack([wb[0], wr[0]], axis=1)                 # (HID, 2)
    w23 = np.zeros((LANES, LANES), np.float64)
    w23[:F, :2] = ws.T @ w_heads
    b23 = np.zeros(LANES, np.float64)
    b23[0] = bs @ wb[0] + bb[0]
    b23[1] = bs @ wr[0] + br[0]

    slab = np.zeros((SLAB_ROWS, LANES), np.float32)
    slab[R_W1:R_W1 + L] = w1
    slab[R_B1] = b1
    slab[R_W23:R_W23 + LANES] = w23
    slab[R_B23] = b23
    return jnp.asarray(slab)


@jax.jit
def multitask_forward(x, w_slab):
    """x: (B, 1, L) float32 (PyTorch NCL layout); w_slab: output of pack_params()."""
    bsz = x.shape[0]
    # Sublane-pad the batch to 8 (single tiny fused op; kernel then stores dense vregs).
    xp = jnp.zeros((B_PAD, L), jnp.float32).at[:bsz, :].set(x[:, 0, :])

    vmem = pl.BlockSpec(memory_space=pltpu.MemorySpace.VMEM)
    out = pl.pallas_call(
        multitask_kernel,
        out_shape=jax.ShapeDtypeStruct((B_PAD, LANES), jnp.float32),
        in_specs=[vmem, vmem],
        out_specs=vmem,
    )(xp, w_slab)

    real = out[:bsz, :2]
    return real[:, 0:1], real[:, 1:2]        # (binary_out, reg_out)


def init_params(key):
    """Deterministic init mimicking PyTorch default (uniform +/- 1/sqrt(fan_in))."""
    ks = jax.random.split(key, 8)

    def u(k, shape, fan_in):
        b = 1.0 / jnp.sqrt(jnp.float32(fan_in))
        return jax.random.uniform(k, shape, jnp.float32, -b, b)

    return {
        "conv_w": u(ks[0], (C_OUT, 1, K), 1 * K),
        "conv_b": u(ks[1], (C_OUT,), 1 * K),
        "fc_shared_w": u(ks[2], (HID, F), F),
        "fc_shared_b": u(ks[3], (HID,), F),
        "fc_binary_w": u(ks[4], (1, HID), HID),
        "fc_binary_b": u(ks[5], (1,), HID),
        "fc_regression_w": u(ks[6], (1, HID), HID),
        "fc_regression_b": u(ks[7], (1,), HID),
    }


def reference_forward(x, p):
    """Pure-numpy float64 replica of the PyTorch forward (ground truth)."""
    x2 = np.asarray(x, np.float64)[:, 0, :]                    # (B, L)
    wc = np.asarray(p["conv_w"], np.float64)[:, 0, :]
    bc = np.asarray(p["conv_b"], np.float64)
    ws = np.asarray(p["fc_shared_w"], np.float64)
    bs = np.asarray(p["fc_shared_b"], np.float64)
    wb = np.asarray(p["fc_binary_w"], np.float64)
    bb = np.asarray(p["fc_binary_b"], np.float64)
    wr = np.asarray(p["fc_regression_w"], np.float64)
    br = np.asarray(p["fc_regression_b"], np.float64)

    xpad = np.pad(x2, ((0, 0), (1, 1)))                        # (B, L+2)
    conv = np.zeros((x2.shape[0], C_OUT, L), np.float64)
    for c in range(C_OUT):
        for l in range(L):
            conv[:, c, l] = xpad[:, l:l + K] @ wc[c] + bc[c]
    conv = np.maximum(conv, 0.0)
    flat = conv.reshape(x2.shape[0], F)                        # channel-major flatten
    shared = flat @ ws.T + bs
    binary = 1.0 / (1.0 + np.exp(-(shared @ wb.T + bb)))
    reg = shared @ wr.T + br
    return binary, reg


if __name__ == "__main__":
    key = jax.random.PRNGKey(0)
    kx, kp = jax.random.split(key)
    x = jax.random.normal(kx, (B, 1, L), dtype=jnp.float32)
    params = init_params(kp)

    w_slab = pack_params(params)          # one-time parameter packing (not per call)

    binary_out, reg_out = multitask_forward(x, w_slab)
    jax.block_until_ready((binary_out, reg_out))

    ref_b, ref_r = reference_forward(np.asarray(x), params)
    assert binary_out.shape == (B, 1) and reg_out.shape == (B, 1)
    assert np.allclose(np.asarray(binary_out), ref_b, atol=1e-5, rtol=1e-5)
    assert np.allclose(np.asarray(reg_out), ref_r, atol=1e-5, rtol=1e-5)

    print("KERNEL_OK")
</pallas_src>

<mosaic_0001>
module attributes {stable_mosaic.version = 11 : i64} {
  func.func @multitask_kernel(%arg0: memref<8x4xf32, #tpu.memory_space<vmem>>, %arg1: memref<152x128xf32, #tpu.memory_space<vmem>>, %arg2: memref<8x128xf32, #tpu.memory_space<vmem>>) attributes {dimension_semantics = [], scalar_prefetch = 0 : i64, scratch_operands = 0 : i64, tpu.core_type = #tpu.core_type<tc>} {
    %c0 = arith.constant 0 : index
    %c0_0 = arith.constant 0 : index
    %0 = vector.load %arg0[%c0, %c0_0] : memref<8x4xf32, #tpu.memory_space<vmem>>, vector<8x4xf32>
    %c0_1 = arith.constant 0 : index
    %c0_2 = arith.constant 0 : index
    %1 = vector.load %arg1[%c0_1, %c0_2] : memref<152x128xf32, #tpu.memory_space<vmem>>, vector<4x128xf32>
    %c8 = arith.constant 8 : index
    %c0_3 = arith.constant 0 : index
    %2 = vector.load %arg1[%c8, %c0_3] : memref<152x128xf32, #tpu.memory_space<vmem>>, vector<1x128xf32>
    %c16 = arith.constant 16 : index
    %c0_4 = arith.constant 0 : index
    %3 = vector.load %arg1[%c16, %c0_4] : memref<152x128xf32, #tpu.memory_space<vmem>>, vector<128x128xf32>
    %c144 = arith.constant 144 : index
    %c0_5 = arith.constant 0 : index
    %4 = vector.load %arg1[%c144, %c0_5] : memref<152x128xf32, #tpu.memory_space<vmem>>, vector<1x128xf32>
    %cst = arith.constant dense<0.000000e+00> : vector<8x128xf32>
    %5 = tpu.matmul %0, %1, %cst {dimension_numbers = #tpu.dot_dimension_numbers<[1], [0], [0], [1], [0, 0, 1, 1], [], []>, precision = #tpu.contract_precision<fp32>} : vector<8x4xf32>, vector<4x128xf32>, vector<8x128xf32> -> vector<8x128xf32>
    %6 = vector.broadcast %2 : vector<1x128xf32> to vector<8x128xf32>
    %7 = arith.addf %5, %6 : vector<8x128xf32>
    %cst_6 = arith.constant 0.000000e+00 : f32
    %8 = vector.broadcast %cst_6 : f32 to vector<8x128xf32>
    %9 = arith.maximumf %7, %8 : vector<8x128xf32>
    %cst_7 = arith.constant dense<0.000000e+00> : vector<8x128xf32>
    %10 = tpu.matmul %9, %3, %cst_7 {dimension_numbers = #tpu.dot_dimension_numbers<[1], [0], [0], [1], [0, 0, 1, 1], [], []>, precision = #tpu.contract_precision<fp32>} : vector<8x128xf32>, vector<128x128xf32>, vector<8x128xf32> -> vector<8x128xf32>
    %11 = vector.broadcast %4 : vector<1x128xf32> to vector<8x128xf32>
    %12 = arith.addf %10, %11 : vector<8x128xf32>
    %13 = arith.negf %12 : vector<8x128xf32>
    %14 = math.exp %13 : vector<8x128xf32>
    %cst_8 = arith.constant 1.000000e+00 : f32
    %15 = vector.broadcast %cst_8 : f32 to vector<8x128xf32>
    %16 = arith.addf %15, %14 : vector<8x128xf32>
    %17 = arith.divf %15, %16 : vector<8x128xf32>
    %18 = tpu.iota {dimensions = array<i32: 1>} : vector<8x128xi32>
    %c0_i32 = arith.constant 0 : i32
    %19 = vector.broadcast %c0_i32 : i32 to vector<8x128xi32>
    %20 = arith.cmpi eq, %18, %19 : vector<8x128xi32>
    %21 = arith.select %20, %17, %12 : vector<8x128xi1>, vector<8x128xf32>
    %c0_9 = arith.constant 0 : index
    %c0_10 = arith.constant 0 : index
    %22 = vector.load %arg2[%c0_9, %c0_10] : memref<8x128xf32, #tpu.memory_space<vmem>>, vector<8x128xf32>
    tpu.vector_store %arg2[%c0_9, %c0_10], %21 {strides = array<i32>} : memref<8x128xf32, #tpu.memory_space<vmem>>, vector<8x128xf32>,
    return
  }
}

</mosaic_0001>

<llo_original>
// kernel: multitask_forward.1
$region0: #{multitask_forward.1}
  #allocation0 [shape = 'u32[]', space=smem, size = 0x4, offset = 0x4, fixed_abs, tag = 'smem constant byte address 0x4 - core index']
  #allocation1 [shape = 'u32[72,128]{1,0:T(1,128)}', space=vmem, size = 0x9000, scoped, tag = 'internal scratch']
  %s0 = inlined_call_operand.vmem [shape: f32[8,4], index: 0, kind: input, shape index: {}]
  %s1 = inlined_call_operand.hbm [shape: f32[152,128], index: 1, kind: input, shape index: {}]
  %s2 = inlined_call_operand.vmem [shape: f32[8,128], index: 2, kind: output, shape index: {}]
  %s3 = sld [smem:[#allocation0]]
  $region22: #{multitask_forward.1} parent=0
    _
  %s5 = ssub.s32 1, %s3
  %s6 = scalar_select 0, %s5, %s3
  $region1: #{multitask_forward.1} parent=0
    #allocation2 [shape = 'u8[77824]{0}', space=vmem, size = 0x13000, scoped, tag = 'input window, operand 1, single buffered']
    #allocation3 [shape = 's32[1]{0}', space=sflag, size = 0x4, scoped, tag = 'scoped memory for multitask_forward.1']
    %7 = vsyncpa [#allocation3], 0
    // Predicated region
    $region2: #{multitask_forward.1} parent=1 // pred_check
      _
    $region3: #{multitask_forward.1} parent=1 // pred_check_branch
      %9 = sbr.rel (0) target = $region5
    $region4: #{multitask_forward.1} parent=1 // pred_region
      _
    $region5: #{multitask_forward.1} parent=1 // pred_fallthru
      _
    // Predicated region
    $region6: #{multitask_forward.1} parent=1 // pred_check
      _
    $region7: #{multitask_forward.1} parent=1 // pred_check_branch
      %11 = sbr.rel (0) target = $region9
    $region8: #{multitask_forward.1} parent=1 // pred_region
      %13 = vsyncadd [#allocation3], 0
      %s14 = sshll.u32 %s1, 4
      %s15 = int_to_ptr.hbm [resolvable:$true] %s14
      %s16 = sshll.u32 [#allocation2], 4
      %s17 = int_to_ptr.vmem [resolvable:$true] %s16
      %22 = dma.hbm_to_vmem [thread:$0]  %s15, 2432, %s17, [#allocation3], 128, 128, 8
    $region9: #{multitask_forward.1} parent=1 // pred_fallthru
      _
    // Predicated region
    $region10: #{multitask_forward.1} parent=1 // pred_check
      _
    $region11: #{multitask_forward.1} parent=1 // pred_check_branch
      %24 = sbr.rel (0) target = $region13
    $region12: #{multitask_forward.1} parent=1 // pred_region
      %26 = dma.done [#allocation3], 2432
    $region13: #{multitask_forward.1} parent=1 // pred_fallthru
      _
    %v27 = vld [vmem:[%s0] sm:$0xff]
    %v28 = vld [vmem:[#allocation2] sm:$0xf]
    %v29 = vld [vmem:[#allocation2 + $0x8] sm:$0x1]
    %v30 = vld [vmem:[#allocation2 + $0x10] sm:$0xff]
    %v31 = vld [vmem:[#allocation2 + $0x18] sm:$0xff]
    %v32 = vld [vmem:[#allocation2 + $0x20] sm:$0xff]
    %v33 = vld [vmem:[#allocation2 + $0x28] sm:$0xff]
    %v34 = vld [vmem:[#allocation2 + $0x30] sm:$0xff]
    %v35 = vld [vmem:[#allocation2 + $0x38] sm:$0xff]
    %v36 = vld [vmem:[#allocation2 + $0x40] sm:$0xff]
    %v37 = vld [vmem:[#allocation2 + $0x48] sm:$0xff]
    %v38 = vld [vmem:[#allocation2 + $0x50] sm:$0xff]
    %v39 = vld [vmem:[#allocation2 + $0x58] sm:$0xff]
    %v40 = vld [vmem:[#allocation2 + $0x60] sm:$0xff]
    %v41 = vld [vmem:[#allocation2 + $0x68] sm:$0xff]
    %v42 = vld [vmem:[#allocation2 + $0x70] sm:$0xff]
    %v43 = vld [vmem:[#allocation2 + $0x78] sm:$0xff]
    %v44 = vld [vmem:[#allocation2 + $0x80] sm:$0xff]
    %v45 = vld [vmem:[#allocation2 + $0x88] sm:$0xff]
    %v46 = vld [vmem:[#allocation2 + $0x90] sm:$0x1]
    %v47 = vperm.slane %v29, 0
    %vm48 = vcmask 31744
    %v50 = vsel %vm48, %v27, 0
    %vm52 = vcmask 1043456
    %v54 = vsel %vm52, %v28, 0
    %56 = vmatpush.msra.mxu0 0.0
    %57 = vmatpush.msra.mxu0 0.0
    %58 = vmatpush.msra.mxu0 0.0
    %59 = vmatpush.msra.mxu0 0.0
    %60 = vmatpush.msra.mxu0 0.0
    %61 = vmatpush.msra.mxu0 0.0
    %62 = vmatpush.msra.mxu0 0.0
    %63 = vmatpush.msra.mxu0 0.0
    %64 = vmatpush.msra.mxu0 0.0
    %65 = vmatpush.msra.mxu0 0.0
    %66 = vmatpush.msra.mxu0 0.0
    %67 = vmatpush.msra.mxu0 0.0
    %68 = vmatpush.msra.mxu0 0.0
    %69 = vmatpush.msra.mxu0 0.0
    %70 = vmatpush.msra.mxu0 0.0
    %v71 = vand.u32 %v54, 4294901760
    %72 = vmatpush.msra.mxu0 %v71
    %v73 = vand.u32 %v50, 4294901760
    %v74 = vsub.f32 %v50, %v73
    %v75 = vand.u32 %v74, 4294901760
    %v76 = vsub.f32 %v74, %v75
    %v77 = vand.u32 %v76, 4294901760
    %78 = vmatmul.f32.gmra.mxu0 %v77
    %v79 = vpop.f32.mrf.mxu0
    %v80 = vadd.f32 %v47, %v79
    %81 = vdwg.mxu0
    %82 = vmatpush.msra.mxu0 0.0
    %83 = vmatpush.msra.mxu0 0.0
    %84 = vmatpush.msra.mxu0 0.0
    %85 = vmatpush.msra.mxu0 0.0
    %86 = vmatpush.msra.mxu0 0.0
    %87 = vmatpush.msra.mxu0 0.0
    %88 = vmatpush.msra.mxu0 0.0
    %89 = vmatpush.msra.mxu0 0.0
    %90 = vmatpush.msra.mxu0 0.0
    %91 = vmatpush.msra.mxu0 0.0
    %92 = vmatpush.msra.mxu0 0.0
    %93 = vmatpush.msra.mxu0 0.0
    %94 = vmatpush.msra.mxu0 0.0
    %95 = vmatpush.msra.mxu0 0.0
    %96 = vmatpush.msra.mxu0 0.0
    %v97 = vand.u32 %v54, 4294901760
    %v98 = vsub.f32 %v54, %v97
    %v99 = vand.u32 %v98, 4294901760
    %v100 = vsub.f32 %v98, %v99
    %v101 = vand.u32 %v100, 4294901760
    %102 = vmatpush.msra.mxu0 %v101
    %v103 = vand.u32 %v50, 4294901760
    %104 = vmatmul.f32.gmra.mxu0 %v103
    %v105 = vpop.f32.mrf.mxu0
    %v106 = vadd.f32 %v80, %v105
    %107 = vdwg.mxu0
    %108 = vmatpush.msra.mxu0 0.0
    %109 = vmatpush.msra.mxu0 0.0
    %110 = vmatpush.msra.mxu0 0.0
    %111 = vmatpush.msra.mxu0 0.0
    %112 = vmatpush.msra.mxu0 0.0
    %113 = vmatpush.msra.mxu0 0.0
    %114 = vmatpush.msra.mxu0 0.0
    %115 = vmatpush.msra.mxu0 0.0
    %116 = vmatpush.msra.mxu0 0.0
    %117 = vmatpush.msra.mxu0 0.0
    %118 = vmatpush.msra.mxu0 0.0
    %119 = vmatpush.msra.mxu0 0.0
    %120 = vmatpush.msra.mxu0 0.0
    %121 = vmatpush.msra.mxu0 0.0
    %122 = vmatpush.msra.mxu0 0.0
    %v123 = vand.u32 %v54, 4294901760
    %v124 = vsub.f32 %v54, %v123
    %125 = vmatpush.msra.mxu0 %v124
    %v126 = vand.u32 %v50, 4294901760
    %v127 = vsub.f32 %v50, %v126
    %128 = vmatmul.f32.gmra.mxu0 %v127
    %v129 = vpop.f32.mrf.mxu0
    %v130 = vadd.f32 %v106, %v129
    %131 = vdwg.mxu0
    %132 = vmatpush.msra.mxu0 0.0
    %133 = vmatpush.msra.mxu0 0.0
    %134 = vmatpush.msra.mxu0 0.0
    %135 = vmatpush.msra.mxu0 0.0
    %136 = vmatpush.msra.mxu0 0.0
    %137 = vmatpush.msra.mxu0 0.0
    %138 = vmatpush.msra.mxu0 0.0
    %139 = vmatpush.msra.mxu0 0.0
    %140 = vmatpush.msra.mxu0 0.0
    %141 = vmatpush.msra.mxu0 0.0
    %142 = vmatpush.msra.mxu0 0.0
    %143 = vmatpush.msra.mxu0 0.0
    %144 = vmatpush.msra.mxu0 0.0
    %145 = vmatpush.msra.mxu0 0.0
    %146 = vmatpush.msra.mxu0 0.0
    %v147 = vand.u32 %v54, 4294901760
    %148 = vmatpush.msra.mxu0 %v147
    %v149 = vand.u32 %v50, 4294901760
    %v150 = vsub.f32 %v50, %v149
    %v151 = vand.u32 %v150, 4294901760
    %152 = vmatmul.f32.gmra.mxu0 %v151
    %v153 = vpop.f32.mrf.mxu0
    %v154 = vadd.f32 %v130, %v153
    %155 = vdwg.mxu0
    %156 = vmatpush.msra.mxu0 0.0
    %157 = vmatpush.msra.mxu0 0.0
    %158 = vmatpush.msra.mxu0 0.0
    %159 = vmatpush.msra.mxu0 0.0
    %160 = vmatpush.msra.mxu0 0.0
    %161 = vmatpush.msra.mxu0 0.0
    %162 = vmatpush.msra.mxu0 0.0
    %163 = vmatpush.msra.mxu0 0.0
    %164 = vmatpush.msra.mxu0 0.0
    %165 = vmatpush.msra.mxu0 0.0
    %166 = vmatpush.msra.mxu0 0.0
    %167 = vmatpush.msra.mxu0 0.0
    %168 = vmatpush.msra.mxu0 0.0
    %169 = vmatpush.msra.mxu0 0.0
    %170 = vmatpush.msra.mxu0 0.0
    %v171 = vand.u32 %v54, 4294901760
    %v172 = vsub.f32 %v54, %v171
    %v173 = vand.u32 %v172, 4294901760
    %174 = vmatpush.msra.mxu0 %v173
    %v175 = vand.u32 %v50, 4294901760
    %176 = vmatmul.f32.gmra.mxu0 %v175
    %v177 = vpop.f32.mrf.mxu0
    %v178 = vadd.f32 %v154, %v177
    %179 = vdwg.mxu0
    %180 = vmatpush.msra.mxu0 0.0
    %181 = vmatpush.msra.mxu0 0.0
    %182 = vmatpush.msra.mxu0 0.0
    %183 = vmatpush.msra.mxu0 0.0
    %184 = vmatpush.msra.mxu0 0.0
    %185 = vmatpush.msra.mxu0 0.0
    %186 = vmatpush.msra.mxu0 0.0
    %187 = vmatpush.msra.mxu0 0.0
    %188 = vmatpush.msra.mxu0 0.0
    %189 = vmatpush.msra.mxu0 0.0
    %190 = vmatpush.msra.mxu0 0.0
    %191 = vmatpush.msra.mxu0 0.0
    %192 = vmatpush.msra.mxu0 0.0
    %193 = vmatpush.msra.mxu0 0.0
    %194 = vmatpush.msra.mxu0 0.0
    %v195 = vand.u32 %v54, 4294901760
    %196 = vmatpush.msra.mxu0 %v195
    %v197 = vand.u32 %v50, 4294901760
    %198 = vmatmul.f32.gmra.mxu0 %v197
    %v199 = vpop.f32.mrf.mxu0
    %v200 = vadd.f32 %v178, %v199
    %201 = vdwg.mxu0
    %v202 = vmax.f32 %v200, 0.0
    %v203 = vperm.slane %v46, 0
    %v204 = vand.u32 %v45, 4294901760
    %205 = vmatpush.msra.mxu0 %v204
    %v206 = vand.u32 %v44, 4294901760
    %207 = vmatpush.msra.mxu0 %v206
    %v208 = vand.u32 %v43, 4294901760
    %209 = vmatpush.msra.mxu0 %v208
    %v210 = vand.u32 %v42, 4294901760
    %211 = vmatpush.msra.mxu0 %v210
    %v212 = vand.u32 %v41, 4294901760
    %213 = vmatpush.msra.mxu0 %v212
    %v214 = vand.u32 %v40, 4294901760
    %215 = vmatpush.msra.mxu0 %v214
    %v216 = vand.u32 %v39, 4294901760
    %217 = vmatpush.msra.mxu0 %v216
    %v218 = vand.u32 %v38, 4294901760
    %219 = vmatpush.msra.mxu0 %v218
    %v220 = vand.u32 %v37, 4294901760
    %221 = vmatpush.msra.mxu0 %v220
    %v222 = vand.u32 %v36, 4294901760
    %223 = vmatpush.msra.mxu0 %v222
    %v224 = vand.u32 %v35, 4294901760
    %225 = vmatpush.msra.mxu0 %v224
    %v226 = vand.u32 %v34, 4294901760
    %227 = vmatpush.msra.mxu0 %v226
    %v228 = vand.u32 %v33, 4294901760
    %229 = vmatpush.msra.mxu0 %v228
    %v230 = vand.u32 %v32, 4294901760
    %231 = vmatpush.msra.mxu0 %v230
    %v232 = vand.u32 %v31, 4294901760
    %233 = vmatpush.msra.mxu0 %v232
    %v234 = vand.u32 %v30, 4294901760
    %235 = vmatpush.msra.mxu0 %v234
    %v236 = vand.u32 %v202, 4294901760
    %v237 = vsub.f32 %v202, %v236
    %v238 = vand.u32 %v237, 4294901760
    %v239 = vsub.f32 %v237, %v238
    %v240 = vand.u32 %v239, 4294901760
    %241 = vmatmul.f32.gmra.mxu0 %v240
    %v242 = vpop.f32.mrf.mxu0
    %v243 = vadd.f32 %v203, %v242
    %244 = vdwg.mxu0
    %v245 = vand.u32 %v45, 4294901760
    %v246 = vsub.f32 %v45, %v245
    %v247 = vand.u32 %v246, 4294901760
    %v248 = vsub.f32 %v246, %v247
    %v249 = vand.u32 %v248, 4294901760
    %250 = vmatpush.msra.mxu0 %v249
    %v251 = vand.u32 %v44, 4294901760
    %v252 = vsub.f32 %v44, %v251
    %v253 = vand.u32 %v252, 4294901760
    %v254 = vsub.f32 %v252, %v253
    %v255 = vand.u32 %v254, 4294901760
    %256 = vmatpush.msra.mxu0 %v255
    %v257 = vand.u32 %v43, 4294901760
    %v258 = vsub.f32 %v43, %v257
    %v259 = vand.u32 %v258, 4294901760
    %v260 = vsub.f32 %v258, %v259
    %v261 = vand.u32 %v260, 4294901760
    %262 = vmatpush.msra.mxu0 %v261
    %v263 = vand.u32 %v42, 4294901760
    %v264 = vsub.f32 %v42, %v263
    %v265 = vand.u32 %v264, 4294901760
    %v266 = vsub.f32 %v264, %v265
    %v267 = vand.u32 %v266, 4294901760
    %268 = vmatpush.msra.mxu0 %v267
    %v269 = vand.u32 %v41, 4294901760
    %v270 = vsub.f32 %v41, %v269
    %v271 = vand.u32 %v270, 4294901760
    %v272 = vsub.f32 %v270, %v271
    %v273 = vand.u32 %v272, 4294901760
    %274 = vmatpush.msra.mxu0 %v273
    %v275 = vand.u32 %v40, 4294901760
    %v276 = vsub.f32 %v40, %v275
    %v277 = vand.u32 %v276, 4294901760
    %v278 = vsub.f32 %v276, %v277
    %v279 = vand.u32 %v278, 4294901760
    %280 = vmatpush.msra.mxu0 %v279
    %v281 = vand.u32 %v39, 4294901760
    %v282 = vsub.f32 %v39, %v281
    %v283 = vand.u32 %v282, 4294901760
    %v284 = vsub.f32 %v282, %v283
    %v285 = vand.u32 %v284, 4294901760
    %286 = vmatpush.msra.mxu0 %v285
    %v287 = vand.u32 %v38, 4294901760
    %v288 = vsub.f32 %v38, %v287
    %v289 = vand.u32 %v288, 4294901760
    %v290 = vsub.f32 %v288, %v289
    %v291 = vand.u32 %v290, 4294901760
    %292 = vmatpush.msra.mxu0 %v291
    %v293 = vand.u32 %v37, 4294901760
    %v294 = vsub.f32 %v37, %v293
    %v295 = vand.u32 %v294, 4294901760
    %v296 = vsub.f32 %v294, %v295
    %v297 = vand.u32 %v296, 4294901760
    %298 = vmatpush.msra.mxu0 %v297
    %v299 = vand.u32 %v36, 4294901760
    %v300 = vsub.f32 %v36, %v299
    %v301 = vand.u32 %v300, 4294901760
    %v302 = vsub.f32 %v300, %v301
    %v303 = vand.u32 %v302, 4294901760
    %304 = vmatpush.msra.mxu0 %v303
    %v305 = vand.u32 %v35, 4294901760
    %v306 = vsub.f32 %v35, %v305
    %v307 = vand.u32 %v306, 4294901760
    %v308 = vsub.f32 %v306, %v307
    %v309 = vand.u32 %v308, 4294901760
    %310 = vmatpush.msra.mxu0 %v309
    %v311 = vand.u32 %v34, 4294901760
    %v312 = vsub.f32 %v34, %v311
    %v313 = vand.u32 %v312, 4294901760
    %v314 = vsub.f32 %v312, %v313
    %v315 = vand.u32 %v314, 4294901760
    %316 = vmatpush.msra.mxu0 %v315
    %v317 = vand.u32 %v33, 4294901760
    %v318 = vsub.f32 %v33, %v317
    %v319 = vand.u32 %v318, 4294901760
    %v320 = vsub.f32 %v318, %v319
    %v321 = vand.u32 %v320, 4294901760
    %322 = vmatpush.msra.mxu0 %v321
    %v323 = vand.u32 %v32, 4294901760
    %v324 = vsub.f32 %v32, %v323
    %v325 = vand.u32 %v324, 4294901760
    %v326 = vsub.f32 %v324, %v325
    %v327 = vand.u32 %v326, 4294901760
    %328 = vmatpush.msra.mxu0 %v327
    %v329 = vand.u32 %v31, 4294901760
    %v330 = vsub.f32 %v31, %v329
    %v331 = vand.u32 %v330, 4294901760
    %v332 = vsub.f32 %v330, %v331
    %v333 = vand.u32 %v332, 4294901760
    %334 = vmatpush.msra.mxu0 %v333
    %v335 = vand.u32 %v30, 4294901760
    %v336 = vsub.f32 %v30, %v335
    %v337 = vand.u32 %v336, 4294901760
    %v338 = vsub.f32 %v336, %v337
    %v339 = vand.u32 %v338, 4294901760
    %340 = vmatpush.msra.mxu0 %v339
    %v341 = vand.u32 %v202, 4294901760
    %342 = vmatmul.f32.gmra.mxu0 %v341
    %v343 = vpop.f32.mrf.mxu0
    %v344 = vadd.f32 %v243, %v343
    %345 = vdwg.mxu0
    %v346 = vand.u32 %v45, 4294901760
    %v347 = vsub.f32 %v45, %v346
    %348 = vmatpush.msra.mxu0 %v347
    %v349 = vand.u32 %v44, 4294901760
    %v350 = vsub.f32 %v44, %v349
    %351 = vmatpush.msra.mxu0 %v350
    %v352 = vand.u32 %v43, 4294901760
    %v353 = vsub.f32 %v43, %v352
    %354 = vmatpush.msra.mxu0 %v353
    %v355 = vand.u32 %v42, 4294901760
    %v356 = vsub.f32 %v42, %v355
    %357 = vmatpush.msra.mxu0 %v356
    %v358 = vand.u32 %v41, 4294901760
    %v359 = vsub.f32 %v41, %v358
    %360 = vmatpush.msra.mxu0 %v359
    %v361 = vand.u32 %v40, 4294901760
    %v362 = vsub.f32 %v40, %v361
    %363 = vmatpush.msra.mxu0 %v362
    %v364 = vand.u32 %v39, 4294901760
    %v365 = vsub.f32 %v39, %v364
    %366 = vmatpush.msra.mxu0 %v365
    %v367 = vand.u32 %v38, 4294901760
    %v368 = vsub.f32 %v38, %v367
    %369 = vmatpush.msra.mxu0 %v368
    %v370 = vand.u32 %v37, 4294901760
    %v371 = vsub.f32 %v37, %v370
    %372 = vmatpush.msra.mxu0 %v371
    %v373 = vand.u32 %v36, 4294901760
    %v374 = vsub.f32 %v36, %v373
    %375 = vmatpush.msra.mxu0 %v374
    %v376 = vand.u32 %v35, 4294901760
    %v377 = vsub.f32 %v35, %v376
    %378 = vmatpush.msra.mxu0 %v377
    %v379 = vand.u32 %v34, 4294901760
    %v380 = vsub.f32 %v34, %v379
    %381 = vmatpush.msra.mxu0 %v380
    %v382 = vand.u32 %v33, 4294901760
    %v383 = vsub.f32 %v33, %v382
    %384 = vmatpush.msra.mxu0 %v383
    %v385 = vand.u32 %v32, 4294901760
    %v386 = vsub.f32 %v32, %v385
    %387 = vmatpush.msra.mxu0 %v386
    %v388 = vand.u32 %v31, 4294901760
    %v389 = vsub.f32 %v31, %v388
    %390 = vmatpush.msra.mxu0 %v389
    %v391 = vand.u32 %v30, 4294901760
    %v392 = vsub.f32 %v30, %v391
    %393 = vmatpush.msra.mxu0 %v392
    %v394 = vand.u32 %v202, 4294901760
    %v395 = vsub.f32 %v202, %v394
    %396 = vmatmul.f32.gmra.mxu0 %v395
    %v397 = vpop.f32.mrf.mxu0
    %v398 = vadd.f32 %v344, %v397
    %399 = vdwg.mxu0
    %v400 = vand.u32 %v45, 4294901760
    %401 = vmatpush.msra.mxu0 %v400
    %v402 = vand.u32 %v44, 4294901760
    %403 = vmatpush.msra.mxu0 %v402
    %v404 = vand.u32 %v43, 4294901760
    %405 = vmatpush.msra.mxu0 %v404
    %v406 = vand.u32 %v42, 4294901760
    %407 = vmatpush.msra.mxu0 %v406
    %v408 = vand.u32 %v41, 4294901760
    %409 = vmatpush.msra.mxu0 %v408
    %v410 = vand.u32 %v40, 4294901760
    %411 = vmatpush.msra.mxu0 %v410
    %v412 = vand.u32 %v39, 4294901760
    %413 = vmatpush.msra.mxu0 %v412
    %v414 = vand.u32 %v38, 4294901760
    %415 = vmatpush.msra.mxu0 %v414
    %v416 = vand.u32 %v37, 4294901760
    %417 = vmatpush.msra.mxu0 %v416
    %v418 = vand.u32 %v36, 4294901760
    %419 = vmatpush.msra.mxu0 %v418
    %v420 = vand.u32 %v35, 4294901760
    %421 = vmatpush.msra.mxu0 %v420
    %v422 = vand.u32 %v34, 4294901760
    %423 = vmatpush.msra.mxu0 %v422
    %v424 = vand.u32 %v33, 4294901760
    %425 = vmatpush.msra.mxu0 %v424
    %v426 = vand.u32 %v32, 4294901760
    %427 = vmatpush.msra.mxu0 %v426
    %v428 = vand.u32 %v31, 4294901760
    %429 = vmatpush.msra.mxu0 %v428
    %v430 = vand.u32 %v30, 4294901760
    %431 = vmatpush.msra.mxu0 %v430
    %v432 = vand.u32 %v202, 4294901760
    %v433 = vsub.f32 %v202, %v432
    %v434 = vand.u32 %v433, 4294901760
    %435 = vmatmul.f32.gmra.mxu0 %v434
    %v436 = vpop.f32.mrf.mxu0
    %v437 = vadd.f32 %v398, %v436
    %438 = vdwg.mxu0
    %v439 = vand.u32 %v45, 4294901760
    %v440 = vsub.f32 %v45, %v439
    %v441 = vand.u32 %v440, 4294901760
    %442 = vmatpush.msra.mxu0 %v441
    %v443 = vand.u32 %v44, 4294901760
    %v444 = vsub.f32 %v44, %v443
    %v445 = vand.u32 %v444, 4294901760
    %446 = vmatpush.msra.mxu0 %v445
    %v447 = vand.u32 %v43, 4294901760
    %v448 = vsub.f32 %v43, %v447
    %v449 = vand.u32 %v448, 4294901760
    %450 = vmatpush.msra.mxu0 %v449
    %v451 = vand.u32 %v42, 4294901760
    %v452 = vsub.f32 %v42, %v451
    %v453 = vand.u32 %v452, 4294901760
    %454 = vmatpush.msra.mxu0 %v453
    %v455 = vand.u32 %v41, 4294901760
    %v456 = vsub.f32 %v41, %v455
    %v457 = vand.u32 %v456, 4294901760
    %458 = vmatpush.msra.mxu0 %v457
    %v459 = vand.u32 %v40, 4294901760
    %v460 = vsub.f32 %v40, %v459
    %v461 = vand.u32 %v460, 4294901760
    %462 = vmatpush.msra.mxu0 %v461
    %v463 = vand.u32 %v39, 4294901760
    %v464 = vsub.f32 %v39, %v463
    %v465 = vand.u32 %v464, 4294901760
    %466 = vmatpush.msra.mxu0 %v465
    %v467 = vand.u32 %v38, 4294901760
    %v468 = vsub.f32 %v38, %v467
    %v469 = vand.u32 %v468, 4294901760
    %470 = vmatpush.msra.mxu0 %v469
    %v471 = vand.u32 %v37, 4294901760
    %v472 = vsub.f32 %v37, %v471
    %v473 = vand.u32 %v472, 4294901760
    %474 = vmatpush.msra.mxu0 %v473
    %v475 = vand.u32 %v36, 4294901760
    %v476 = vsub.f32 %v36, %v475
    %v477 = vand.u32 %v476, 4294901760
    %478 = vmatpush.msra.mxu0 %v477
    %v479 = vand.u32 %v35, 4294901760
    %v480 = vsub.f32 %v35, %v479
    %v481 = vand.u32 %v480, 4294901760
    %482 = vmatpush.msra.mxu0 %v481
    %v483 = vand.u32 %v34, 4294901760
    %v484 = vsub.f32 %v34, %v483
    %v485 = vand.u32 %v484, 4294901760
    %486 = vmatpush.msra.mxu0 %v485
    %v487 = vand.u32 %v33, 4294901760
    %v488 = vsub.f32 %v33, %v487
    %v489 = vand.u32 %v488, 4294901760
    %490 = vmatpush.msra.mxu0 %v489
    %v491 = vand.u32 %v32, 4294901760
    %v492 = vsub.f32 %v32, %v491
    %v493 = vand.u32 %v492, 4294901760
    %494 = vmatpush.msra.mxu0 %v493
    %v495 = vand.u32 %v31, 4294901760
    %v496 = vsub.f32 %v31, %v495
    %v497 = vand.u32 %v496, 4294901760
    %498 = vmatpush.msra.mxu0 %v497
    %v499 = vand.u32 %v30, 4294901760
    %v500 = vsub.f32 %v30, %v499
    %v501 = vand.u32 %v500, 4294901760
    %502 = vmatpush.msra.mxu0 %v501
    %v503 = vand.u32 %v202, 4294901760
    %504 = vmatmul.f32.gmra.mxu0 %v503
    %v505 = vpop.f32.mrf.mxu0
    %v506 = vadd.f32 %v437, %v505
    %507 = vdwg.mxu0
    %v508 = vand.u32 %v45, 4294901760
    %509 = vmatpush.msra.mxu0 %v508
    %v510 = vand.u32 %v44, 4294901760
    %511 = vmatpush.msra.mxu0 %v510
    %v512 = vand.u32 %v43, 4294901760
    %513 = vmatpush.msra.mxu0 %v512
    %v514 = vand.u32 %v42, 4294901760
    %515 = vmatpush.msra.mxu0 %v514
    %v516 = vand.u32 %v41, 4294901760
    %517 = vmatpush.msra.mxu0 %v516
    %v518 = vand.u32 %v40, 4294901760
    %519 = vmatpush.msra.mxu0 %v518
    %v520 = vand.u32 %v39, 4294901760
    %521 = vmatpush.msra.mxu0 %v520
    %v522 = vand.u32 %v38, 4294901760
    %523 = vmatpush.msra.mxu0 %v522
    %v524 = vand.u32 %v37, 4294901760
    %525 = vmatpush.msra.mxu0 %v524
    %v526 = vand.u32 %v36, 4294901760
    %527 = vmatpush.msra.mxu0 %v526
    %v528 = vand.u32 %v35, 4294901760
    %529 = vmatpush.msra.mxu0 %v528
    %v530 = vand.u32 %v34, 4294901760
    %531 = vmatpush.msra.mxu0 %v530
    %v532 = vand.u32 %v33, 4294901760
    %533 = vmatpush.msra.mxu0 %v532
    %v534 = vand.u32 %v32, 4294901760
    %535 = vmatpush.msra.mxu0 %v534
    %v536 = vand.u32 %v31, 4294901760
    %537 = vmatpush.msra.mxu0 %v536
    %v538 = vand.u32 %v30, 4294901760
    %539 = vmatpush.msra.mxu0 %v538
    %v540 = vand.u32 %v202, 4294901760
    %541 = vmatmul.f32.gmra.mxu0 %v540
    %v542 = vpop.f32.mrf.mxu0
    %v543 = vadd.f32 %v506, %v542
    %544 = vdwg.mxu0
    %v545 = vxor.u32 %v543, 2147483648
    %v546 = vmul.f32 %v545, 1.442695
    %v547 = vpow.pop %v546
    %v548 = vadd.f32 %v547, 1.0
    %v549 = vrcp.pop %v548
    %v550 = vmul.f32 %v548, %v549
    %v551 = vsub.f32 1.0, %v550
    %v552 = vmul.f32 %v549, %v551
    %v553 = vadd.f32 %v549, %v552
    %vm554 = vweird.f32 %v548
    %vm555 = vweird.f32 %v549
    %vm556 = vmor %vm554, %vm555
    %v557 = vsel %vm556, %v549, %v553
    %v558 = vand.u32 2147483647, %v548
    %vm559 = vcmp.eq.f32.partialorder %v558, 8.507059e+37
    %v560 = vand.u32 %v548, 2147483648
    %v561 = vor.u32 1.1754944e-38, %v560
    %v562 = vsel %vm559, %v561, %v557
    %v563 = vmul.f32 1.0, %v562
    %v564 = vlaneseq
    %v565 = vand.u32 %v564, 127
    %vm566 = vcmp.eq.s32.totalorder %v565, 0
    %v567 = vsel %vm566, %v563, %v543
    %568 = vst [vmem:[%s2] sm:$0xff] %v567
    // Predicated region
    $region14: #{multitask_forward.1} parent=1 // pred_check
      _
    $region15: #{multitask_forward.1} parent=1 // pred_check_branch
      %570 = sbr.rel (0) target = $region17
    $region16: #{multitask_forward.1} parent=1 // pred_region
      _
    $region17: #{multitask_forward.1} parent=1 // pred_fallthru
      _
    // Predicated region
    $region18: #{multitask_forward.1} parent=1 // pred_check
      _
    $region19: #{multitask_forward.1} parent=1 // pred_check_branch
      %572 = sbr.rel (0) target = $region21
    $region20: #{multitask_forward.1} parent=1 // pred_region
      _
    $region21: #{multitask_forward.1} parent=1 // pred_fallthru
      _
    %573 = vsyncpa [#allocation3], 1

</llo_original>
